<compile_context>
chip_gen: v5e
topology: v5e:2x2
jax: 0.10.0
libtpu: 0.0.40
codegen_flags: <defaults>
</compile_context>

<pallas_src>
import jax
import jax.numpy as jnp
from jax.experimental import pallas as pl
from jax.experimental.pallas import tpu as pltpu

S_DIM = 3   # Pendulum-v0 observation dim
A_DIM = 1   # Pendulum-v0 action dim
H1 = 64
H2 = 32
_BIAS_LEN = H1 + 3 * H2 + 1  # 64 + 32 + 32 + 32 + 1 = 161


def _round_up(x, m):
    return (x + m - 1) // m * m


def critic_kernel(sa_ref, ws1_ref, ws2_ref, wa1_ref, w2_ref, w3_ref, bias_ref,
                  out_ref):
    # sa_ref: (S_DIM + A_DIM, TB)   batch tile on the lane axis
    sa = sa_ref[...]
    state_t = sa[:S_DIM, :]                    # (3, TB)
    action_t = sa[S_DIM:S_DIM + A_DIM, :]      # (1, TB)

    # Packed biases, stored as column vectors (broadcast along lanes).
    bs1 = bias_ref[0:H1, :]                            # (64, 1)
    bs2 = bias_ref[H1:H1 + H2, :]                      # (32, 1)
    ba1 = bias_ref[H1 + H2:H1 + 2 * H2, :]             # (32, 1)
    b2 = bias_ref[H1 + 2 * H2:H1 + 3 * H2, :]          # (32, 1)
    b3 = bias_ref[H1 + 3 * H2:H1 + 3 * H2 + 1, :]      # (1, 1)

    # s1 = relu(Ws1 @ state + bs1)            (64,3)@(3,TB) -> (64,TB)
    s1 = jnp.maximum(
        jnp.dot(ws1_ref[...], state_t, preferred_element_type=jnp.float32) + bs1,
        0.0)

    # s2 = relu(Ws2 @ s1 + bs2)               (32,64)@(64,TB) -> (32,TB)
    s2 = jnp.maximum(
        jnp.dot(ws2_ref[...], s1, preferred_element_type=jnp.float32) + bs2,
        0.0)

    # a1 = relu(Wa1 @ action + ba1), K=1 -> VPU outer product (32,1)*(1,TB)
    a1 = jnp.maximum(wa1_ref[...] * action_t + ba1, 0.0)

    # x = relu(W2 @ concat([s2; a1]) + b2)    single K=64 MXU push
    h = jnp.concatenate([s2, a1], axis=0)      # (64, TB)
    x = jnp.maximum(
        jnp.dot(w2_ref[...], h, preferred_element_type=jnp.float32) + b2,
        0.0)

    # q = W3 @ x + b3, N(out)=1 -> VPU multiply + sublane (XLU) reduce
    q = jnp.sum(w3_ref[...] * x, axis=0, keepdims=True) + b3   # (1, TB)

    out_ref[...] = q.astype(out_ref.dtype)


def critic_forward(state, action, params, *, lane_tile=512):
    """state: (B, S_DIM), action: (B, A_DIM) -> q: (B, 1). Weights in PyTorch
    (out, in) layout; batch is mapped to the lane axis inside the kernel."""
    B = state.shape[0]

    # Fuse state|action and transpose so batch is the minor (lane) dim.
    sa = jnp.concatenate([state, action], axis=1).astype(jnp.float32).T  # (4, B)

    tb = min(lane_tile, _round_up(B, 128))
    b_pad = _round_up(B, tb)
    if b_pad != B:
        sa = jnp.pad(sa, ((0, 0), (0, b_pad - B)))
    grid = (b_pad // tb,)

    # Pack all biases into one buffer; column-vector layout for lane broadcast.
    bias = jnp.concatenate(
        [params["bs1"], params["bs2"], params["ba1"], params["b2"], params["b3"]]
    ).reshape(_BIAS_LEN, 1).astype(jnp.float32)
    w3_col = params["w3"].T  # (32, 1) for the VPU reduce form

    feat = S_DIM + A_DIM
    grid_spec = pltpu.PrefetchScalarGridSpec(
        num_scalar_prefetch=0,
        grid=grid,
        in_specs=[
            pl.BlockSpec((feat, tb), lambda i: (0, i)),        # sa (tiled)
            pl.BlockSpec((H1, S_DIM), lambda i: (0, 0)),       # Ws1 (resident)
            pl.BlockSpec((H2, H1), lambda i: (0, 0)),          # Ws2
            pl.BlockSpec((H2, A_DIM), lambda i: (0, 0)),       # Wa1
            pl.BlockSpec((H2, 2 * H2), lambda i: (0, 0)),      # W2 (fused)
            pl.BlockSpec((H2, 1), lambda i: (0, 0)),           # W3 (column)
            pl.BlockSpec((_BIAS_LEN, 1), lambda i: (0, 0)),    # packed biases
        ],
        out_specs=pl.BlockSpec((1, tb), lambda i: (0, i)),
    )

    out = pl.pallas_call(
        critic_kernel,
        out_shape=jax.ShapeDtypeStruct((1, b_pad), jnp.float32),
        grid_spec=grid_spec,
        compiler_params=pltpu.CompilerParams(
            dimension_semantics=("parallel",)),
    )(sa, params["ws1"], params["ws2"], params["wa1"], params["w2"],
      w3_col, bias)

    return out[:, :B].T  # (B, 1)


def init_params(key):
    """nn.Linear-style init, U(-1/sqrt(fan_in), 1/sqrt(fan_in)).
    Weights kept in PyTorch (out_features, in_features) layout."""
    def linear(k, fan_in, fan_out):
        kw, kb = jax.random.split(k)
        bound = 1.0 / jnp.sqrt(jnp.float32(fan_in))
        w = jax.random.uniform(kw, (fan_out, fan_in), jnp.float32, -bound, bound)
        b = jax.random.uniform(kb, (fan_out,), jnp.float32, -bound, bound)
        return w, b

    k1, k2, k3, k4, k5 = jax.random.split(key, 5)
    ws1, bs1 = linear(k1, S_DIM, H1)       # fcs1: Linear(3, 64)
    ws2, bs2 = linear(k2, H1, H2)          # fcs2: Linear(64, 32)
    wa1, ba1 = linear(k3, A_DIM, H2)       # fca1: Linear(1, 32)
    w2, b2 = linear(k4, 2 * H2, H2)        # fc2 : Linear(64, 32)
    w3, b3 = linear(k5, H2, 1)             # fc3 : Linear(32, 1)

    return {
        "ws1": ws1, "bs1": bs1,
        "ws2": ws2, "bs2": bs2,
        "wa1": wa1, "ba1": ba1,
        "w2": w2, "b2": b2,
        "w3": w3, "b3": b3,
    }


def critic_ref(state, action, p):
    """Pure-JAX reference mirroring the PyTorch forward (y = x @ W.T + b)."""
    s1 = jax.nn.relu(state @ p["ws1"].T + p["bs1"])
    s2 = jax.nn.relu(s1 @ p["ws2"].T + p["bs2"])
    a1 = jax.nn.relu(action @ p["wa1"].T + p["ba1"])
    x = jnp.concatenate([s2, a1], axis=1)
    x = jax.nn.relu(x @ p["w2"].T + p["b2"])
    return x @ p["w3"].T + p["b3"]


if __name__ == "__main__":
    key = jax.random.PRNGKey(0)
    kp, ks, ka = jax.random.split(key, 3)

    B = 8  # small DDPG-style batch
    params = init_params(kp)
    state = jax.random.normal(ks, (B, S_DIM), jnp.float32)
    action = jax.random.uniform(ka, (B, A_DIM), jnp.float32, -2.0, 2.0)

    q = jax.jit(critic_forward)(state, action, params)
    jax.block_until_ready(q)

    q_ref = critic_ref(state, action, params)
    assert q.shape == (B, 1)
    assert jnp.allclose(q, q_ref, atol=1e-5, rtol=1e-5), (q, q_ref)

    print("KERNEL_OK")
</pallas_src>

<mosaic_0001>
module attributes {stable_mosaic.version = 11 : i64} {
  func.func @critic_kernel(%arg0: i32, %arg1: memref<4x128xf32, #tpu.memory_space<vmem>>, %arg2: memref<64x3xf32, #tpu.memory_space<vmem>>, %arg3: memref<32x64xf32, #tpu.memory_space<vmem>>, %arg4: memref<32x1xf32, #tpu.memory_space<vmem>>, %arg5: memref<32x64xf32, #tpu.memory_space<vmem>>, %arg6: memref<32x1xf32, #tpu.memory_space<vmem>>, %arg7: memref<161x1xf32, #tpu.memory_space<vmem>>, %arg8: memref<1x128xf32, #tpu.memory_space<vmem>>) attributes {dimension_semantics = [#tpu.dimension_semantics<parallel>], iteration_bounds = array<i64: 1>, scalar_prefetch = 0 : i64, scratch_operands = 0 : i64, tpu.core_type = #tpu.core_type<tc>, window_params = [{transform_indices = @transform_0, window_bounds = array<i64: 4, 128>}, {pipeline_mode = #tpu.pipeline_mode<synchronous>, transform_indices = @transform_1, window_bounds = array<i64: 64, 3>}, {pipeline_mode = #tpu.pipeline_mode<synchronous>, transform_indices = @transform_2, window_bounds = array<i64: 32, 64>}, {pipeline_mode = #tpu.pipeline_mode<synchronous>, transform_indices = @transform_3, window_bounds = array<i64: 32, 1>}, {pipeline_mode = #tpu.pipeline_mode<synchronous>, transform_indices = @transform_4, window_bounds = array<i64: 32, 64>}, {pipeline_mode = #tpu.pipeline_mode<synchronous>, transform_indices = @transform_5, window_bounds = array<i64: 32, 1>}, {pipeline_mode = #tpu.pipeline_mode<synchronous>, transform_indices = @transform_6, window_bounds = array<i64: 161, 1>}, {transform_indices = @transform_7, window_bounds = array<i64: 1, 128>}]} {
    %c0 = arith.constant 0 : index
    %c0_0 = arith.constant 0 : index
    %0 = vector.load %arg1[%c0, %c0_0] : memref<4x128xf32, #tpu.memory_space<vmem>>, vector<4x128xf32>
    %1 = vector.extract_strided_slice %0 {offsets = [0, 0], sizes = [3, 128], strides = [1, 1]} : vector<4x128xf32> to vector<3x128xf32>
    %2 = vector.extract_strided_slice %0 {offsets = [3, 0], sizes = [1, 128], strides = [1, 1]} : vector<4x128xf32> to vector<1x128xf32>
    %c0_1 = arith.constant 0 : index
    %c0_2 = arith.constant 0 : index
    %3 = vector.load %arg7[%c0_1, %c0_2] : memref<161x1xf32, #tpu.memory_space<vmem>>, vector<64x1xf32>
    %c64 = arith.constant 64 : index
    %c0_3 = arith.constant 0 : index
    %4 = vector.load %arg7[%c64, %c0_3] : memref<161x1xf32, #tpu.memory_space<vmem>>, vector<32x1xf32>
    %c96 = arith.constant 96 : index
    %c0_4 = arith.constant 0 : index
    %5 = vector.load %arg7[%c96, %c0_4] : memref<161x1xf32, #tpu.memory_space<vmem>>, vector<32x1xf32>
    %c128 = arith.constant 128 : index
    %c0_5 = arith.constant 0 : index
    %6 = vector.load %arg7[%c128, %c0_5] : memref<161x1xf32, #tpu.memory_space<vmem>>, vector<32x1xf32>
    %c160 = arith.constant 160 : index
    %c0_6 = arith.constant 0 : index
    %7 = vector.load %arg7[%c160, %c0_6] : memref<161x1xf32, #tpu.memory_space<vmem>>, vector<1x1xf32>
    %c0_7 = arith.constant 0 : index
    %c0_8 = arith.constant 0 : index
    %8 = vector.load %arg2[%c0_7, %c0_8] : memref<64x3xf32, #tpu.memory_space<vmem>>, vector<64x3xf32>
    %cst = arith.constant dense<0.000000e+00> : vector<64x128xf32>
    %9 = tpu.matmul %8, %1, %cst {dimension_numbers = #tpu.dot_dimension_numbers<[1], [0], [0], [1], [0, 0, 1, 1], [], []>} : vector<64x3xf32>, vector<3x128xf32>, vector<64x128xf32> -> vector<64x128xf32>
    %10 = vector.broadcast %3 : vector<64x1xf32> to vector<64x128xf32>
    %11 = arith.addf %9, %10 : vector<64x128xf32>
    %cst_9 = arith.constant 0.000000e+00 : f32
    %12 = vector.broadcast %cst_9 : f32 to vector<64x128xf32>
    %13 = arith.maximumf %11, %12 : vector<64x128xf32>
    %c0_10 = arith.constant 0 : index
    %c0_11 = arith.constant 0 : index
    %14 = vector.load %arg3[%c0_10, %c0_11] : memref<32x64xf32, #tpu.memory_space<vmem>>, vector<32x64xf32>
    %cst_12 = arith.constant dense<0.000000e+00> : vector<32x128xf32>
    %15 = tpu.matmul %14, %13, %cst_12 {dimension_numbers = #tpu.dot_dimension_numbers<[1], [0], [0], [1], [0, 0, 1, 1], [], []>} : vector<32x64xf32>, vector<64x128xf32>, vector<32x128xf32> -> vector<32x128xf32>
    %16 = vector.broadcast %4 : vector<32x1xf32> to vector<32x128xf32>
    %17 = arith.addf %15, %16 : vector<32x128xf32>
    %cst_13 = arith.constant 0.000000e+00 : f32
    %18 = vector.broadcast %cst_13 : f32 to vector<32x128xf32>
    %19 = arith.maximumf %17, %18 : vector<32x128xf32>
    %c0_14 = arith.constant 0 : index
    %c0_15 = arith.constant 0 : index
    %20 = vector.load %arg4[%c0_14, %c0_15] : memref<32x1xf32, #tpu.memory_space<vmem>>, vector<32x1xf32>
    %21 = vector.broadcast %20 : vector<32x1xf32> to vector<32x128xf32>
    %22 = vector.broadcast %2 : vector<1x128xf32> to vector<32x128xf32>
    %23 = arith.mulf %21, %22 : vector<32x128xf32>
    %24 = vector.broadcast %5 : vector<32x1xf32> to vector<32x128xf32>
    %25 = arith.addf %23, %24 : vector<32x128xf32>
    %cst_16 = arith.constant 0.000000e+00 : f32
    %26 = vector.broadcast %cst_16 : f32 to vector<32x128xf32>
    %27 = arith.maximumf %25, %26 : vector<32x128xf32>
    %28 = tpu.concatenate %19, %27 in 0 : vector<32x128xf32>, vector<32x128xf32> -> vector<64x128xf32>
    %c0_17 = arith.constant 0 : index
    %c0_18 = arith.constant 0 : index
    %29 = vector.load %arg5[%c0_17, %c0_18] : memref<32x64xf32, #tpu.memory_space<vmem>>, vector<32x64xf32>
    %cst_19 = arith.constant dense<0.000000e+00> : vector<32x128xf32>
    %30 = tpu.matmul %29, %28, %cst_19 {dimension_numbers = #tpu.dot_dimension_numbers<[1], [0], [0], [1], [0, 0, 1, 1], [], []>} : vector<32x64xf32>, vector<64x128xf32>, vector<32x128xf32> -> vector<32x128xf32>
    %31 = vector.broadcast %6 : vector<32x1xf32> to vector<32x128xf32>
    %32 = arith.addf %30, %31 : vector<32x128xf32>
    %cst_20 = arith.constant 0.000000e+00 : f32
    %33 = vector.broadcast %cst_20 : f32 to vector<32x128xf32>
    %34 = arith.maximumf %32, %33 : vector<32x128xf32>
    %c0_21 = arith.constant 0 : index
    %c0_22 = arith.constant 0 : index
    %35 = vector.load %arg6[%c0_21, %c0_22] : memref<32x1xf32, #tpu.memory_space<vmem>>, vector<32x1xf32>
    %36 = vector.broadcast %35 : vector<32x1xf32> to vector<32x128xf32>
    %37 = arith.mulf %36, %34 : vector<32x128xf32>
    %cst_23 = arith.constant dense<0.000000e+00> : vector<128xf32>
    %38 = vector.multi_reduction <add>, %37, %cst_23 [0] : vector<32x128xf32> to vector<128xf32>
    %39 = vector.shape_cast %38 : vector<128xf32> to vector<1x128xf32>
    %40 = vector.broadcast %7 : vector<1x1xf32> to vector<1x128xf32>
    %41 = arith.addf %39, %40 : vector<1x128xf32>
    %c0_24 = arith.constant 0 : index
    %c0_25 = arith.constant 0 : index
    %42 = vector.load %arg8[%c0_24, %c0_25] : memref<1x128xf32, #tpu.memory_space<vmem>>, vector<1x128xf32>
    tpu.vector_store %arg8[%c0_24, %c0_25], %41 {strides = array<i32>} : memref<1x128xf32, #tpu.memory_space<vmem>>, vector<1x128xf32>,
    return
  }
  func.func @transform_0(%arg0: i32) -> (i32, i32) {
    %c0_i32 = arith.constant 0 : i32
    %c0_i32_0 = arith.constant 0 : i32
    return %c0_i32, %arg0 : i32, i32
  }
  func.func @transform_1(%arg0: i32) -> (i32, i32) {
    %c0_i32 = arith.constant 0 : i32
    %c0_i32_0 = arith.constant 0 : i32
    %c0_i32_1 = arith.constant 0 : i32
    return %c0_i32, %c0_i32_0 : i32, i32
  }
  func.func @transform_2(%arg0: i32) -> (i32, i32) {
    %c0_i32 = arith.constant 0 : i32
    %c0_i32_0 = arith.constant 0 : i32
    %c0_i32_1 = arith.constant 0 : i32
    return %c0_i32, %c0_i32_0 : i32, i32
  }
  func.func @transform_3(%arg0: i32) -> (i32, i32) {
    %c0_i32 = arith.constant 0 : i32
    %c0_i32_0 = arith.constant 0 : i32
    %c0_i32_1 = arith.constant 0 : i32
    return %c0_i32, %c0_i32_0 : i32, i32
  }
  func.func @transform_4(%arg0: i32) -> (i32, i32) {
    %c0_i32 = arith.constant 0 : i32
    %c0_i32_0 = arith.constant 0 : i32
    %c0_i32_1 = arith.constant 0 : i32
    return %c0_i32, %c0_i32_0 : i32, i32
  }
  func.func @transform_5(%arg0: i32) -> (i32, i32) {
    %c0_i32 = arith.constant 0 : i32
    %c0_i32_0 = arith.constant 0 : i32
    %c0_i32_1 = arith.constant 0 : i32
    return %c0_i32, %c0_i32_0 : i32, i32
  }
  func.func @transform_6(%arg0: i32) -> (i32, i32) {
    %c0_i32 = arith.constant 0 : i32
    %c0_i32_0 = arith.constant 0 : i32
    %c0_i32_1 = arith.constant 0 : i32
    return %c0_i32, %c0_i32_0 : i32, i32
  }
  func.func @transform_7(%arg0: i32) -> (i32, i32) {
    %c0_i32 = arith.constant 0 : i32
    %c0_i32_0 = arith.constant 0 : i32
    return %c0_i32, %arg0 : i32, i32
  }
}

</mosaic_0001>

<llo_original>
// kernel: critic_forward.1
$region0: #{critic_forward.1}
  #allocation0 [shape = 'u32[]', space=smem, size = 0x4, offset = 0x4, fixed_abs, tag = 'smem constant byte address 0x4 - core index']
  #allocation1 [shape = 'u32[72,128]{1,0:T(1,128)}', space=vmem, size = 0x9000, scoped, tag = 'internal scratch']
  %s0 = inlined_call_operand.vmem [shape: f32[4,128], index: 0, kind: input, shape index: {}]
  %s1 = inlined_call_operand.vmem [shape: f32[64,3], index: 1, kind: input, shape index: {}]
  %s2 = inlined_call_operand.vmem [shape: f32[32,64], index: 2, kind: input, shape index: {}]
  %s3 = inlined_call_operand.vmem [shape: f32[32,1], index: 3, kind: input, shape index: {}]
  %s4 = inlined_call_operand.vmem [shape: f32[32,64], index: 4, kind: input, shape index: {}]
  %s5 = inlined_call_operand.vmem [shape: f32[32,1], index: 5, kind: input, shape index: {}]
  %s6 = inlined_call_operand.vmem [shape: f32[161,1], index: 6, kind: input, shape index: {}]
  %s7 = inlined_call_operand.vmem [shape: f32[1,128], index: 7, kind: output, shape index: {}]
  %s8 = sld [smem:[#allocation0]]
  $region38: #{critic_forward.1} parent=0
    _
  %s10 = ssub.s32 1, %s8
  %s11 = scalar_select 0, %s10, %s8
  // Predicated region
  $region2: #{critic_forward.1} parent=0 // pred_check
    _
  $region3: #{critic_forward.1} parent=0 // pred_check_branch
    %13 = sbr.rel (0) target = $region5
  $region4: #{critic_forward.1} parent=0 // pred_region
    _
  $region5: #{critic_forward.1} parent=0 // pred_fallthru
    _
  // Predicated region
  $region6: #{critic_forward.1} parent=0 // pred_check
    _
  $region7: #{critic_forward.1} parent=0 // pred_check_branch
    %15 = sbr.rel (0) target = $region9
  $region8: #{critic_forward.1} parent=0 // pred_region
    _
  $region9: #{critic_forward.1} parent=0 // pred_fallthru
    _
  // Predicated region
  $region10: #{critic_forward.1} parent=0 // pred_check
    _
  $region11: #{critic_forward.1} parent=0 // pred_check_branch
    %17 = sbr.rel (0) target = $region13
  $region12: #{critic_forward.1} parent=0 // pred_region
    _
  $region13: #{critic_forward.1} parent=0 // pred_fallthru
    _
  // Predicated region
  $region14: #{critic_forward.1} parent=0 // pred_check
    _
  $region15: #{critic_forward.1} parent=0 // pred_check_branch
    %19 = sbr.rel (0) target = $region17
  $region16: #{critic_forward.1} parent=0 // pred_region
    _
  $region17: #{critic_forward.1} parent=0 // pred_fallthru
    _
  // Predicated region
  $region18: #{critic_forward.1} parent=0 // pred_check
    _
  $region19: #{critic_forward.1} parent=0 // pred_check_branch
    %21 = sbr.rel (0) target = $region21
  $region20: #{critic_forward.1} parent=0 // pred_region
    _
  $region21: #{critic_forward.1} parent=0 // pred_fallthru
    _
  // Predicated region
  $region22: #{critic_forward.1} parent=0 // pred_check
    _
  $region23: #{critic_forward.1} parent=0 // pred_check_branch
    %23 = sbr.rel (0) target = $region25
  $region24: #{critic_forward.1} parent=0 // pred_region
    _
  $region25: #{critic_forward.1} parent=0 // pred_fallthru
    _
  // Predicated region
  $region26: #{critic_forward.1} parent=0 // pred_check
    _
  $region27: #{critic_forward.1} parent=0 // pred_check_branch
    %25 = sbr.rel (0) target = $region29
  $region28: #{critic_forward.1} parent=0 // pred_region
    _
  $region29: #{critic_forward.1} parent=0 // pred_fallthru
    _
  %v26 = vld [vmem:[%s0] sm:$0xf]
  %v27 = vld [vmem:[%s6] sm:$0xff]
  %v28 = vld [vmem:[%s6 + $0x8] sm:$0xff]
  %v29 = vld [vmem:[%s6 + $0x10] sm:$0xff]
  %v30 = vld [vmem:[%s6 + $0x18] sm:$0xff]
  %v31 = vld [vmem:[%s6 + $0x20] sm:$0xff]
  %v32 = vld [vmem:[%s6 + $0x28] sm:$0xff]
  %v33 = vld [vmem:[%s6 + $0x30] sm:$0xff]
  %v34 = vld [vmem:[%s6 + $0x38] sm:$0xff]
  %v35 = vld [vmem:[%s6 + $0x40] sm:$0xff]
  %v36 = vld [vmem:[%s6 + $0x48] sm:$0xff]
  %v37 = vld [vmem:[%s6 + $0x50] sm:$0xff]
  %v38 = vld [vmem:[%s6 + $0x58] sm:$0xff]
  %v39 = vld [vmem:[%s6 + $0x60] sm:$0xff]
  %v40 = vld [vmem:[%s6 + $0x68] sm:$0xff]
  %v41 = vld [vmem:[%s6 + $0x70] sm:$0xff]
  %v42 = vld [vmem:[%s6 + $0x78] sm:$0xff]
  %v43 = vld [vmem:[%s6 + $0x80] sm:$0xff]
  %v44 = vld [vmem:[%s6 + $0x88] sm:$0xff]
  %v45 = vld [vmem:[%s6 + $0x90] sm:$0xff]
  %v46 = vld [vmem:[%s6 + $0x98] sm:$0xff]
  %v47 = vld [vmem:[%s6 + $0xa0] sm:$0x1]
  %v48 = vld [vmem:[%s1] sm:$0xff]
  %v49 = vld [vmem:[%s1 + $0x8] sm:$0xff]
  %v50 = vld [vmem:[%s1 + $0x10] sm:$0xff]
  %v51 = vld [vmem:[%s1 + $0x18] sm:$0xff]
  %v52 = vld [vmem:[%s1 + $0x20] sm:$0xff]
  %v53 = vld [vmem:[%s1 + $0x28] sm:$0xff]
  %v54 = vld [vmem:[%s1 + $0x30] sm:$0xff]
  %v55 = vld [vmem:[%s1 + $0x38] sm:$0xff]
  %57 = vset.pattern.permute.xlu0 0
  %58 = vperm.xlu0 %57, %v27
  %v59 = vpop.permute.xlu0 %58
  %62 = vset.pattern.permute.xlu0 0
  %63 = vperm.xlu0 %62, %v28
  %v64 = vpop.permute.xlu0 %63
  %67 = vset.pattern.permute.xlu0 0
  %68 = vperm.xlu0 %67, %v29
  %v69 = vpop.permute.xlu0 %68
  %72 = vset.pattern.permute.xlu0 0
  %73 = vperm.xlu0 %72, %v30
  %v74 = vpop.permute.xlu0 %73
  %77 = vset.pattern.permute.xlu0 0
  %78 = vperm.xlu0 %77, %v31
  %v79 = vpop.permute.xlu0 %78
  %82 = vset.pattern.permute.xlu0 0
  %83 = vperm.xlu0 %82, %v32
  %v84 = vpop.permute.xlu0 %83
  %87 = vset.pattern.permute.xlu0 0
  %88 = vperm.xlu0 %87, %v33
  %v89 = vpop.permute.xlu0 %88
  %92 = vset.pattern.permute.xlu0 0
  %93 = vperm.xlu0 %92, %v34
  %v94 = vpop.permute.xlu0 %93
  %vm96 = vcmask 23552
  %v98 = vsel %vm96, %v48, 0
  %v101 = vsel %vm96, %v49, 0
  %v104 = vsel %vm96, %v50, 0
  %v107 = vsel %vm96, %v51, 0
  %v110 = vsel %vm96, %v52, 0
  %v113 = vsel %vm96, %v53, 0
  %v116 = vsel %vm96, %v54, 0
  %v119 = vsel %vm96, %v55, 0
  %vm121 = vcmask 1042432
  %v123 = vsel %vm121, %v26, 0
  %125 = vmatpush.msra.mxu0 0.0
  %126 = vmatpush.msra.mxu0 0.0
  %127 = vmatpush.msra.mxu0 0.0
  %128 = vmatpush.msra.mxu0 0.0
  %129 = vmatpush.msra.mxu0 0.0
  %130 = vmatpush.msra.mxu0 0.0
  %131 = vmatpush.msra.mxu0 0.0
  %132 = vmatpush.msra.mxu0 0.0
  %133 = vmatpush.msra.mxu0 0.0
  %134 = vmatpush.msra.mxu0 0.0
  %135 = vmatpush.msra.mxu0 0.0
  %136 = vmatpush.msra.mxu0 0.0
  %137 = vmatpush.msra.mxu0 0.0
  %138 = vmatpush.msra.mxu0 0.0
  %139 = vmatpush.msra.mxu0 0.0
  %140 = vmatpush.msra.mxu0 %v123
  %141 = vmatmul.f32.gmra.mxu0 %v98
  %v142 = vpop.f32.mrf.mxu0
  %v143 = vadd.f32 %v59, %v142
  %144 = vmatmul.f32.gmra.mxu0 %v101
  %v145 = vpop.f32.mrf.mxu0
  %v146 = vadd.f32 %v64, %v145
  %147 = vmatmul.f32.gmra.mxu0 %v104
  %v148 = vpop.f32.mrf.mxu0
  %v149 = vadd.f32 %v69, %v148
  %150 = vmatmul.f32.gmra.mxu0 %v107
  %v151 = vpop.f32.mrf.mxu0
  %v152 = vadd.f32 %v74, %v151
  %153 = vmatmul.f32.gmra.mxu0 %v110
  %v154 = vpop.f32.mrf.mxu0
  %v155 = vadd.f32 %v79, %v154
  %156 = vmatmul.f32.gmra.mxu0 %v113
  %v157 = vpop.f32.mrf.mxu0
  %v158 = vadd.f32 %v84, %v157
  %159 = vmatmul.f32.gmra.mxu0 %v116
  %v160 = vpop.f32.mrf.mxu0
  %v161 = vadd.f32 %v89, %v160
  %162 = vmatmul.f32.gmra.mxu0 %v119
  %v163 = vpop.f32.mrf.mxu0
  %v164 = vadd.f32 %v94, %v163
  %165 = vdwg.mxu0
  %v166 = vmax.f32 %v143, 0.0
  %v167 = vmax.f32 %v146, 0.0
  %v168 = vmax.f32 %v149, 0.0
  %v169 = vmax.f32 %v152, 0.0
  %v170 = vmax.f32 %v155, 0.0
  %v171 = vmax.f32 %v158, 0.0
  %v172 = vmax.f32 %v161, 0.0
  %v173 = vmax.f32 %v164, 0.0
  %v174 = vld [vmem:[%s2] sm:$0xff]
  %v175 = vld [vmem:[%s2 + $0x8] sm:$0xff]
  %v176 = vld [vmem:[%s2 + $0x10] sm:$0xff]
  %v177 = vld [vmem:[%s2 + $0x18] sm:$0xff]
  %179 = vset.pattern.permute.xlu0 0
  %180 = vperm.xlu0 %179, %v35
  %v181 = vpop.permute.xlu0 %180
  %184 = vset.pattern.permute.xlu0 0
  %185 = vperm.xlu0 %184, %v36
  %v186 = vpop.permute.xlu0 %185
  %189 = vset.pattern.permute.xlu0 0
  %190 = vperm.xlu0 %189, %v37
  %v191 = vpop.permute.xlu0 %190
  %194 = vset.pattern.permute.xlu0 0
  %195 = vperm.xlu0 %194, %v38
  %v196 = vpop.permute.xlu0 %195
  %vm198 = vcmask 523264
  %v200 = vsel %vm198, %v174, 0
  %v203 = vsel %vm198, %v175, 0
  %v206 = vsel %vm198, %v176, 0
  %v209 = vsel %vm198, %v177, 0
  %211 = vmatpush.msra.mxu0 0.0
  %212 = vmatpush.msra.mxu0 0.0
  %213 = vmatpush.msra.mxu0 0.0
  %214 = vmatpush.msra.mxu0 0.0
  %215 = vmatpush.msra.mxu0 0.0
  %216 = vmatpush.msra.mxu0 0.0
  %217 = vmatpush.msra.mxu0 0.0
  %218 = vmatpush.msra.mxu0 0.0
  %219 = vmatpush.msra.mxu0 %v173
  %220 = vmatpush.msra.mxu0 %v172
  %221 = vmatpush.msra.mxu0 %v171
  %222 = vmatpush.msra.mxu0 %v170
  %223 = vmatpush.msra.mxu0 %v169
  %224 = vmatpush.msra.mxu0 %v168
  %225 = vmatpush.msra.mxu0 %v167
  %226 = vmatpush.msra.mxu0 %v166
  %227 = vmatmul.f32.gmra.mxu0 %v200
  %v228 = vpop.f32.mrf.mxu0
  %v229 = vadd.f32 %v181, %v228
  %230 = vmatmul.f32.gmra.mxu0 %v203
  %v231 = vpop.f32.mrf.mxu0
  %v232 = vadd.f32 %v186, %v231
  %233 = vmatmul.f32.gmra.mxu0 %v206
  %v234 = vpop.f32.mrf.mxu0
  %v235 = vadd.f32 %v191, %v234
  %236 = vmatmul.f32.gmra.mxu0 %v209
  %v237 = vpop.f32.mrf.mxu0
  %v238 = vadd.f32 %v196, %v237
  %239 = vdwg.mxu0
  %v240 = vmax.f32 %v229, 0.0
  %v241 = vmax.f32 %v232, 0.0
  %v242 = vmax.f32 %v235, 0.0
  %v243 = vmax.f32 %v238, 0.0
  %v244 = vld [vmem:[%s3] sm:$0xff]
  %v245 = vld [vmem:[%s3 + $0x8] sm:$0xff]
  %v246 = vld [vmem:[%s3 + $0x10] sm:$0xff]
  %v247 = vld [vmem:[%s3 + $0x18] sm:$0xff]
  %249 = vset.pattern.permute.xlu0 0
  %250 = vperm.xlu0 %249, %v244
  %v251 = vpop.permute.xlu0 %250
  %254 = vset.pattern.permute.xlu0 0
  %255 = vperm.xlu0 %254, %v245
  %v256 = vpop.permute.xlu0 %255
  %259 = vset.pattern.permute.xlu0 0
  %260 = vperm.xlu0 %259, %v246
  %v261 = vpop.permute.xlu0 %260
  %264 = vset.pattern.permute.xlu0 0
  %265 = vperm.xlu0 %264, %v247
  %v266 = vpop.permute.xlu0 %265
  %v268 = vperm.slane %v26, 3
  %v269 = vmul.f32 %v251, %v268
  %v270 = vmul.f32 %v256, %v268
  %v271 = vmul.f32 %v261, %v268
  %v272 = vmul.f32 %v266, %v268
  %274 = vset.pattern.permute.xlu0 0
  %275 = vperm.xlu0 %274, %v39
  %v276 = vpop.permute.xlu0 %275
  %279 = vset.pattern.permute.xlu0 0
  %280 = vperm.xlu0 %279, %v40
  %v281 = vpop.permute.xlu0 %280
  %284 = vset.pattern.permute.xlu0 0
  %285 = vperm.xlu0 %284, %v41
  %v286 = vpop.permute.xlu0 %285
  %289 = vset.pattern.permute.xlu0 0
  %290 = vperm.xlu0 %289, %v42
  %v291 = vpop.permute.xlu0 %290
  %v293 = vadd.f32 %v269, %v276
  %v294 = vadd.f32 %v270, %v281
  %v295 = vadd.f32 %v271, %v286
  %v296 = vadd.f32 %v272, %v291
  %v297 = vmax.f32 %v293, 0.0
  %v298 = vmax.f32 %v294, 0.0
  %v299 = vmax.f32 %v295, 0.0
  %v300 = vmax.f32 %v296, 0.0
  %v301 = vld [vmem:[%s4] sm:$0xff]
  %v302 = vld [vmem:[%s4 + $0x8] sm:$0xff]
  %v303 = vld [vmem:[%s4 + $0x10] sm:$0xff]
  %v304 = vld [vmem:[%s4 + $0x18] sm:$0xff]
  %306 = vset.pattern.permute.xlu0 0
  %307 = vperm.xlu0 %306, %v43
  %v308 = vpop.permute.xlu0 %307
  %311 = vset.pattern.permute.xlu0 0
  %312 = vperm.xlu0 %311, %v44
  %v313 = vpop.permute.xlu0 %312
  %316 = vset.pattern.permute.xlu0 0
  %317 = vperm.xlu0 %316, %v45
  %v318 = vpop.permute.xlu0 %317
  %321 = vset.pattern.permute.xlu0 0
  %322 = vperm.xlu0 %321, %v46
  %v323 = vpop.permute.xlu0 %322
  %v326 = vsel %vm198, %v301, 0
  %v329 = vsel %vm198, %v302, 0
  %v332 = vsel %vm198, %v303, 0
  %v335 = vsel %vm198, %v304, 0
  %337 = vmatpush.msra.mxu0 0.0
  %338 = vmatpush.msra.mxu0 0.0
  %339 = vmatpush.msra.mxu0 0.0
  %340 = vmatpush.msra.mxu0 0.0
  %341 = vmatpush.msra.mxu0 0.0
  %342 = vmatpush.msra.mxu0 0.0
  %343 = vmatpush.msra.mxu0 0.0
  %344 = vmatpush.msra.mxu0 0.0
  %345 = vmatpush.msra.mxu0 %v300
  %346 = vmatpush.msra.mxu0 %v299
  %347 = vmatpush.msra.mxu0 %v298
  %348 = vmatpush.msra.mxu0 %v297
  %349 = vmatpush.msra.mxu0 %v243
  %350 = vmatpush.msra.mxu0 %v242
  %351 = vmatpush.msra.mxu0 %v241
  %352 = vmatpush.msra.mxu0 %v240
  %353 = vmatmul.f32.gmra.mxu0 %v326
  %v354 = vpop.f32.mrf.mxu0
  %v355 = vadd.f32 %v308, %v354
  %356 = vmatmul.f32.gmra.mxu0 %v329
  %v357 = vpop.f32.mrf.mxu0
  %v358 = vadd.f32 %v313, %v357
  %359 = vmatmul.f32.gmra.mxu0 %v332
  %v360 = vpop.f32.mrf.mxu0
  %v361 = vadd.f32 %v318, %v360
  %362 = vmatmul.f32.gmra.mxu0 %v335
  %v363 = vpop.f32.mrf.mxu0
  %v364 = vadd.f32 %v323, %v363
  %365 = vdwg.mxu0
  %v366 = vmax.f32 %v355, 0.0
  %v367 = vmax.f32 %v358, 0.0
  %v368 = vmax.f32 %v361, 0.0
  %v369 = vmax.f32 %v364, 0.0
  %v370 = vld [vmem:[%s5] sm:$0xff]
  %v371 = vld [vmem:[%s5 + $0x8] sm:$0xff]
  %v372 = vld [vmem:[%s5 + $0x10] sm:$0xff]
  %v373 = vld [vmem:[%s5 + $0x18] sm:$0xff]
  %375 = vset.pattern.permute.xlu0 0
  %376 = vperm.xlu0 %375, %v370
  %v377 = vpop.permute.xlu0 %376
  %380 = vset.pattern.permute.xlu0 0
  %381 = vperm.xlu0 %380, %v371
  %v382 = vpop.permute.xlu0 %381
  %385 = vset.pattern.permute.xlu0 0
  %386 = vperm.xlu0 %385, %v372
  %v387 = vpop.permute.xlu0 %386
  %390 = vset.pattern.permute.xlu0 0
  %391 = vperm.xlu0 %390, %v373
  %v392 = vpop.permute.xlu0 %391
  %v394 = vmul.f32 %v377, %v366
  %v395 = vmul.f32 %v382, %v367
  %v396 = vmul.f32 %v387, %v368
  %v397 = vmul.f32 %v392, %v369
  %v398 = vadd.f32 %v394, %v395
  %v399 = vadd.f32 %v398, %v396
  %v400 = vadd.f32 %v399, %v397
  %v401 = vrot.slane %v400, 4
  %v402 = vadd.f32 %v400, %v401
  %v403 = vrot.slane %v402, 2
  %v404 = vadd.f32 %v402, %v403
  %v405 = vrot.slane %v404, 1
  %v406 = vadd.f32 %v404, %v405
  %408 = vset.pattern.permute.xlu0 0
  %409 = vperm.xlu0 %408, %v47
  %v410 = vpop.permute.xlu0 %409
  %v412 = vadd.f32 %v406, %v410
  %413 = vst [vmem:[%s7] sm:$0x1] %v412
  // Predicated region
  $region30: #{critic_forward.1} parent=0 // pred_check
    _
  $region31: #{critic_forward.1} parent=0 // pred_check_branch
    %415 = sbr.rel (0) target = $region33
  $region32: #{critic_forward.1} parent=0 // pred_region
    _
  $region33: #{critic_forward.1} parent=0 // pred_fallthru
    _
  // Predicated region
  $region34: #{critic_forward.1} parent=0 // pred_check
    _
  $region35: #{critic_forward.1} parent=0 // pred_check_branch
    %417 = sbr.rel (0) target = $region37
  $region36: #{critic_forward.1} parent=0 // pred_region
    _
  $region37: #{critic_forward.1} parent=0 // pred_fallthru
    _

</llo_original>
